<compile_context>
chip_gen: v7x
topology: tpu7x:2x2x1
jax: 0.10.0
libtpu: 0.0.40
codegen_flags: <defaults>
</compile_context>

<pallas_src>
import math

import numpy as np
import jax
import jax.numpy as jnp
from jax.experimental import pallas as pl
from jax.experimental.pallas import tpu as pltpu


def _hann_separable_weights(filter_size: int = 5) -> np.ndarray:
    """1D weights wa such that the module's normalized 2D filter == wa (x) wa."""
    a = np.hanning(filter_size)[1:-1]          # [0.5, 1.0, 0.5] for filter_size=5
    return (a / a.sum()).astype(np.float64)    # [0.25, 0.5, 0.25]


def _make_l2pool_filter(filter_size: int = 5) -> np.ndarray:
    """2D filter exactly as built in the module's __init__ (for the reference)."""
    a = np.hanning(filter_size)[1:-1]
    g = a[:, None] * a[None, :]
    return (g / g.sum()).astype(np.float32)


def _l2pool_kernel_factory(Wp: int, w0: float, w1: float, w2: float):
    # Wp: padded input width (= 2*Wo). w0/w1/w2: separable Hann taps (0.25/0.5/0.25).

    def kernel(x_ref, m_ref, mask_ref, o_ref):
        # x_ref : (tb*Ho, 2*Wp)  row R=(image t, out-row i):
        #            cols [0, Wp)   = input row 2i
        #            cols [Wp, 2Wp) = input row 2i+1
        # m_ref : (Wp, Wo)   horizontal 3-tap + stride-2 selection matrix
        # mask  : (tb*Ho, 1) 0.0 at each image's first output row, else 1.0
        # o_ref : (tb*Ho, Wo)
        f32 = jnp.float32

        rE = x_ref[:, :Wp].astype(f32)          # squared even input rows (2i)
        rE = rE * rE
        rO = x_ref[:, Wp:].astype(f32)          # squared odd  input rows (2i+1)
        rO = rO * rO

        # Vertical 3-tap (stride 2 is already baked into the row layout):
        #   v[R] = w0 * row(2i-1) + w1 * row(2i) + w2 * row(2i+1)
        # row(2i-1) is rO shifted down one block-row; the conv's zero padding at
        # the top of every image is enforced by the precomputed 0/1 mask.
        rO_up = jnp.concatenate([jnp.zeros_like(rO[:1]), rO[:-1]], axis=0)
        rO_up = rO_up * mask_ref[...]
        v = w1 * rE + w2 * rO + w0 * rO_up      # (tb*Ho, Wp)

        # Horizontal 3-tap + stride-2 as one small matmul on the (idle) MXU.
        acc = jnp.dot(v, m_ref[...],
                      preferred_element_type=f32,
                      precision=jax.lax.Precision.HIGHEST)

        o_ref[...] = jnp.sqrt(acc + 1e-12).astype(o_ref.dtype)

    return kernel


def l2pooling(x, filter_size: int = 5, stride: int = 2, pad_off: int = 0):
    """x: (N, C, H, W) -> (N, C, Ho, Wo).  Matches the PyTorch L2pooling module."""
    del pad_off  # unused by the reference module's forward/init as written
    if filter_size != 5 or stride != 2:
        # TODO(synk): general filter_size/stride path (the network only uses 5 / 2).
        raise NotImplementedError("Pallas L2pooling implements filter_size=5, stride=2.")

    N, C, H, W = x.shape
    pad = (filter_size - 2) // 2             # 1
    K = filter_size - 2                      # 3
    Ho = (H + 2 * pad - K) // stride + 1
    Wo = (W + 2 * pad - K) // stride + 1
    Hp, Wp = 2 * Ho, 2 * Wo                  # Hp - H, Wp - W are in {0, 1}
    wa = _hann_separable_weights(filter_size)
    w0, w1, w2 = (float(v) for v in wa)      # 0.25, 0.5, 0.25

    # ---- free re-view of the input; pad only when H or W is odd ----
    B = N * C
    x3 = x.reshape(B, H, W)
    if (Hp, Wp) != (H, W):
        x3 = jnp.pad(x3, ((0, 0), (0, Hp - H), (0, Wp - W)))
    # Row R = (image, output row) holds input rows (2i, 2i+1) side by side.
    x2d = x3.reshape(B * Ho, 2 * Wp)

    # ---- horizontal 3-tap + stride-2 folded into a (Wp, Wo) matrix ----
    M = np.zeros((Wp, Wo), np.float32)
    for j in range(Wo):
        for dj, wt in enumerate((w0, w1, w2)):   # taps at input columns 2j-1+dj
            c = 2 * j - 1 + dj
            if 0 <= c < Wp:                       # c == -1 (j=0) is the conv zero pad
                M[c, j] = wt
    M = jnp.asarray(M)

    # ---- tiling: whole images per block, ~4 MiB f32 of input per block ----
    BLOCK_ELEMS = 1024 * 1024
    per_img = Hp * Wp
    tb = max(1, BLOCK_ELEMS // max(1, per_img))
    if tb < B:
        m_align = 8 // math.gcd(Ho, 8)        # keep tb*Ho a multiple of 8 (sublane tile)
        tb = max(m_align, (tb // m_align) * m_align)
    tb = min(tb, B)                           # full-extent block is always legal
    # TODO(synk): images so large that even the minimum aligned block overflows
    # scoped VMEM would need an in-image (halo) split along H.

    rows_blk = tb * Ho
    mask = np.ones((rows_blk, 1), np.float32)
    mask[0::Ho] = 0.0                         # each image's first output row: top pad
    mask = jnp.asarray(mask)

    kernel = _l2pool_kernel_factory(Wp, w0, w1, w2)
    out2d = pl.pallas_call(
        kernel,
        out_shape=jax.ShapeDtypeStruct((B * Ho, Wo), x.dtype),
        grid=(pl.cdiv(B, tb),),
        in_specs=[
            pl.BlockSpec((rows_blk, 2 * Wp), lambda b: (b, 0)),
            pl.BlockSpec((Wp, Wo), lambda b: (0, 0)),
            pl.BlockSpec((rows_blk, 1), lambda b: (0, 0)),
        ],
        out_specs=pl.BlockSpec((rows_blk, Wo), lambda b: (b, 0)),
        compiler_params=pltpu.CompilerParams(
            dimension_semantics=("parallel",),
            vmem_limit_bytes=32 * 1024 * 1024),
    )(x2d, M, mask)

    return out2d.reshape(N, C, Ho, Wo)


def l2pooling_ref(x, filter_size: int = 5, stride: int = 2):
    """Plain-JAX reference mirroring the PyTorch forward (for validation)."""
    N, C, H, W = x.shape
    pad = (filter_size - 2) // 2
    w = _make_l2pool_filter(filter_size)
    filt = jnp.broadcast_to(jnp.asarray(w)[None, None],
                            (C, 1, w.shape[0], w.shape[1]))
    out = jax.lax.conv_general_dilated(
        x * x, filt,
        window_strides=(stride, stride),
        padding=((pad, pad), (pad, pad)),
        dimension_numbers=("NCHW", "OIHW", "NCHW"),
        feature_group_count=C,
        precision=jax.lax.Precision.HIGHEST)
    return jnp.sqrt(out + 1e-12)


if __name__ == "__main__":
    # Tolerance: both sides compute in f32; the kernel's MXU pass uses HIGHEST
    # precision, so only multi-pass rounding differences (~1e-7) are expected.
    RTOL = ATOL = 1e-4

    # Primary case.
    x = jax.random.normal(jax.random.PRNGKey(0), (2, 4, 16, 16), dtype=jnp.float32)
    out = jax.block_until_ready(l2pooling(x, filter_size=5, stride=2))
    assert out.shape == (2, 4, 8, 8), out.shape
    np.testing.assert_allclose(np.asarray(out), np.asarray(l2pooling_ref(x)),
                               rtol=RTOL, atol=ATOL)

    # Odd / non-square spatial dims exercise the boundary-padding path.
    x2 = jax.random.normal(jax.random.PRNGKey(1), (1, 3, 13, 9), dtype=jnp.float32)
    out2 = jax.block_until_ready(l2pooling(x2, filter_size=5, stride=2))
    assert out2.shape == (1, 3, 7, 5), out2.shape
    np.testing.assert_allclose(np.asarray(out2), np.asarray(l2pooling_ref(x2)),
                               rtol=RTOL, atol=ATOL)

    print("KERNEL_OK")
</pallas_src>

<mosaic_0001>
module attributes {stable_mosaic.version = 11 : i64} {
  func.func @kernel(%arg0: i32, %arg1: memref<64x32xf32, #tpu.memory_space<vmem>>, %arg2: memref<16x8xf32, #tpu.memory_space<vmem>>, %arg3: memref<64x1xf32, #tpu.memory_space<vmem>>, %arg4: memref<64x8xf32, #tpu.memory_space<vmem>>) attributes {dimension_semantics = [#tpu.dimension_semantics<parallel>], iteration_bounds = array<i64: 1>, scalar_prefetch = 0 : i64, scratch_operands = 0 : i64, tpu.core_type = #tpu.core_type<tc>, window_params = [{transform_indices = @transform_0, window_bounds = array<i64: 64, 32>}, {pipeline_mode = #tpu.pipeline_mode<synchronous>, transform_indices = @transform_1, window_bounds = array<i64: 16, 8>}, {pipeline_mode = #tpu.pipeline_mode<synchronous>, transform_indices = @transform_2, window_bounds = array<i64: 64, 1>}, {transform_indices = @transform_3, window_bounds = array<i64: 64, 8>}]} {
    %c0 = arith.constant 0 : index
    %c0_0 = arith.constant 0 : index
    %0 = vector.load %arg1[%c0, %c0_0] : memref<64x32xf32, #tpu.memory_space<vmem>>, vector<64x16xf32>
    %1 = arith.mulf %0, %0 : vector<64x16xf32>
    %c0_1 = arith.constant 0 : index
    %c16 = arith.constant 16 : index
    %2 = vector.load %arg1[%c0_1, %c16] : memref<64x32xf32, #tpu.memory_space<vmem>>, vector<64x16xf32>
    %3 = arith.mulf %2, %2 : vector<64x16xf32>
    %cst = arith.constant 0.000000e+00 : f32
    %4 = vector.broadcast %cst : f32 to vector<1x16xf32>
    %5 = vector.extract_strided_slice %3 {offsets = [0, 0], sizes = [63, 16], strides = [1, 1]} : vector<64x16xf32> to vector<63x16xf32>
    %6 = tpu.concatenate %4, %5 in 0 : vector<1x16xf32>, vector<63x16xf32> -> vector<64x16xf32>
    %c0_2 = arith.constant 0 : index
    %c0_3 = arith.constant 0 : index
    %7 = vector.load %arg3[%c0_2, %c0_3] : memref<64x1xf32, #tpu.memory_space<vmem>>, vector<64x1xf32>
    %8 = vector.broadcast %7 : vector<64x1xf32> to vector<64x16xf32>
    %9 = arith.mulf %6, %8 : vector<64x16xf32>
    %cst_4 = arith.constant 5.000000e-01 : f32
    %10 = vector.broadcast %cst_4 : f32 to vector<64x16xf32>
    %11 = arith.mulf %10, %1 : vector<64x16xf32>
    %cst_5 = arith.constant 2.500000e-01 : f32
    %12 = vector.broadcast %cst_5 : f32 to vector<64x16xf32>
    %13 = arith.mulf %12, %3 : vector<64x16xf32>
    %14 = arith.addf %11, %13 : vector<64x16xf32>
    %cst_6 = arith.constant 2.500000e-01 : f32
    %15 = vector.broadcast %cst_6 : f32 to vector<64x16xf32>
    %16 = arith.mulf %15, %9 : vector<64x16xf32>
    %17 = arith.addf %14, %16 : vector<64x16xf32>
    %c0_7 = arith.constant 0 : index
    %c0_8 = arith.constant 0 : index
    %18 = vector.load %arg2[%c0_7, %c0_8] : memref<16x8xf32, #tpu.memory_space<vmem>>, vector<16x8xf32>
    %cst_9 = arith.constant dense<0.000000e+00> : vector<64x8xf32>
    %19 = tpu.matmul %17, %18, %cst_9 {dimension_numbers = #tpu.dot_dimension_numbers<[1], [0], [0], [1], [0, 0, 1, 1], [], []>, precision = #tpu.contract_precision<fp32>} : vector<64x16xf32>, vector<16x8xf32>, vector<64x8xf32> -> vector<64x8xf32>
    %cst_10 = arith.constant 9.99999996E-13 : f32
    %20 = vector.broadcast %cst_10 : f32 to vector<64x8xf32>
    %21 = arith.addf %19, %20 : vector<64x8xf32>
    %22 = math.sqrt %21 : vector<64x8xf32>
    %c0_11 = arith.constant 0 : index
    %c0_12 = arith.constant 0 : index
    %23 = vector.load %arg4[%c0_11, %c0_12] : memref<64x8xf32, #tpu.memory_space<vmem>>, vector<64x8xf32>
    tpu.vector_store %arg4[%c0_11, %c0_12], %22 {strides = array<i32>} : memref<64x8xf32, #tpu.memory_space<vmem>>, vector<64x8xf32>,
    return
  }
  func.func @transform_0(%arg0: i32) -> (i32, i32) {
    %c0_i32 = arith.constant 0 : i32
    %c0_i32_0 = arith.constant 0 : i32
    return %arg0, %c0_i32 : i32, i32
  }
  func.func @transform_1(%arg0: i32) -> (i32, i32) {
    %c0_i32 = arith.constant 0 : i32
    %c0_i32_0 = arith.constant 0 : i32
    %c0_i32_1 = arith.constant 0 : i32
    return %c0_i32, %c0_i32_0 : i32, i32
  }
  func.func @transform_2(%arg0: i32) -> (i32, i32) {
    %c0_i32 = arith.constant 0 : i32
    %c0_i32_0 = arith.constant 0 : i32
    %c0_i32_1 = arith.constant 0 : i32
    return %c0_i32, %c0_i32_0 : i32, i32
  }
  func.func @transform_3(%arg0: i32) -> (i32, i32) {
    %c0_i32 = arith.constant 0 : i32
    %c0_i32_0 = arith.constant 0 : i32
    return %arg0, %c0_i32 : i32, i32
  }
}

</mosaic_0001>

<llo_original>
// kernel: tpu_custom_call.1
$region0: #{tpu_custom_call.1}
  #allocation0 [shape = 'u32[]', space=smem, size = 0x4, offset = 0x4, fixed_abs, tag = 'smem constant byte address 0x4 - core index']
  #allocation1 [shape = 'u32[144,128]{1,0:T(1,128)}', space=vmem, size = 0x12000, scoped, tag = 'internal scratch']
  %s0 = inlined_call_operand.vmem [shape: f32[64,32], index: 0, kind: input, shape index: {}]
  %s1 = inlined_call_operand.vmem [shape: f32[16,8], index: 1, kind: input, shape index: {}]
  %s2 = inlined_call_operand.vmem [shape: f32[64,1], index: 2, kind: input, shape index: {}]
  %s3 = inlined_call_operand.vmem [shape: f32[64,8], index: 3, kind: output, shape index: {}]
  %s4 = sld [smem:[#allocation0]]
  $region22: #{tpu_custom_call.1} parent=0
    _
  %s6 = ssub.s32 1, %s4
  %s7 = scalar_select 0, %s6, %s4
  // Predicated region
  $region2: #{tpu_custom_call.1} parent=0 // pred_check
    _
  $region3: #{tpu_custom_call.1} parent=0 // pred_check_branch
    %9 = sbr.rel (0) target = $region5
  $region4: #{tpu_custom_call.1} parent=0 // pred_region
    _
  $region5: #{tpu_custom_call.1} parent=0 // pred_fallthru
    _
  // Predicated region
  $region6: #{tpu_custom_call.1} parent=0 // pred_check
    _
  $region7: #{tpu_custom_call.1} parent=0 // pred_check_branch
    %11 = sbr.rel (0) target = $region9
  $region8: #{tpu_custom_call.1} parent=0 // pred_region
    _
  $region9: #{tpu_custom_call.1} parent=0 // pred_fallthru
    _
  // Predicated region
  $region10: #{tpu_custom_call.1} parent=0 // pred_check
    _
  $region11: #{tpu_custom_call.1} parent=0 // pred_check_branch
    %13 = sbr.rel (0) target = $region13
  $region12: #{tpu_custom_call.1} parent=0 // pred_region
    _
  $region13: #{tpu_custom_call.1} parent=0 // pred_fallthru
    _
  %v14 = vld [vmem:[%s0] sm:$0xff]
  %v15 = vld [vmem:[%s0 + $0x8] sm:$0xff]
  %v16 = vld [vmem:[%s0 + $0x10] sm:$0xff]
  %v17 = vld [vmem:[%s0 + $0x18] sm:$0xff]
  %v18 = vld [vmem:[%s0 + $0x20] sm:$0xff]
  %v19 = vld [vmem:[%s0 + $0x28] sm:$0xff]
  %v20 = vld [vmem:[%s0 + $0x30] sm:$0xff]
  %v21 = vld [vmem:[%s0 + $0x38] sm:$0xff]
  %v22 = vmul.f32 %v14, %v14
  %v23 = vmul.f32 %v15, %v15
  %v24 = vmul.f32 %v16, %v16
  %v25 = vmul.f32 %v17, %v17
  %v26 = vmul.f32 %v18, %v18
  %v27 = vmul.f32 %v19, %v19
  %v28 = vmul.f32 %v20, %v20
  %v29 = vmul.f32 %v21, %v21
  %vm38 = vcmask 1040384
  %v39 = vrot.slane %v22, 7
  %v40 = vrot.slane %v23, 7
  %v41 = vsel %vm38, %v39, %v40
  %v42 = vrot.slane %v24, 7
  %v43 = vsel %vm38, %v40, %v42
  %v44 = vrot.slane %v25, 7
  %v45 = vsel %vm38, %v42, %v44
  %v46 = vrot.slane %v26, 7
  %v47 = vsel %vm38, %v44, %v46
  %v48 = vrot.slane %v27, 7
  %v49 = vsel %vm38, %v46, %v48
  %v50 = vrot.slane %v28, 7
  %v51 = vsel %vm38, %v48, %v50
  %v52 = vrot.slane %v29, 7
  %v53 = vsel %vm38, %v50, %v52
  %54 = vrot.lane.b32.xlu0 %v39, 112
  %v55 = vpop.permute.xlu0 %54
  %56 = vrot.lane.b32.xlu0 %v41, 112
  %v57 = vpop.permute.xlu0 %56
  %58 = vrot.lane.b32.xlu0 %v43, 112
  %v59 = vpop.permute.xlu0 %58
  %60 = vrot.lane.b32.xlu0 %v45, 112
  %v61 = vpop.permute.xlu0 %60
  %62 = vrot.lane.b32.xlu0 %v47, 112
  %v63 = vpop.permute.xlu0 %62
  %64 = vrot.lane.b32.xlu0 %v49, 112
  %v65 = vpop.permute.xlu0 %64
  %66 = vrot.lane.b32.xlu0 %v51, 112
  %v67 = vpop.permute.xlu0 %66
  %68 = vrot.lane.b32.xlu0 %v53, 112
  %v69 = vpop.permute.xlu0 %68
  %v78 = vsel %vm38, 0.0, %v55
  %v79 = vld [vmem:[%s2] sm:$0xff]
  %v80 = vld [vmem:[%s2 + $0x8] sm:$0xff]
  %v81 = vld [vmem:[%s2 + $0x10] sm:$0xff]
  %v82 = vld [vmem:[%s2 + $0x18] sm:$0xff]
  %v83 = vld [vmem:[%s2 + $0x20] sm:$0xff]
  %v84 = vld [vmem:[%s2 + $0x28] sm:$0xff]
  %v85 = vld [vmem:[%s2 + $0x30] sm:$0xff]
  %v86 = vld [vmem:[%s2 + $0x38] sm:$0xff]
  %88 = vset.pattern.permute.xlu0 0
  %89 = vperm.xlu0 %88, %v79
  %v90 = vpop.permute.xlu0 %89
  %93 = vset.pattern.permute.xlu0 0
  %94 = vperm.xlu0 %93, %v80
  %v95 = vpop.permute.xlu0 %94
  %98 = vset.pattern.permute.xlu0 0
  %99 = vperm.xlu0 %98, %v81
  %v100 = vpop.permute.xlu0 %99
  %103 = vset.pattern.permute.xlu0 0
  %104 = vperm.xlu0 %103, %v82
  %v105 = vpop.permute.xlu0 %104
  %108 = vset.pattern.permute.xlu0 0
  %109 = vperm.xlu0 %108, %v83
  %v110 = vpop.permute.xlu0 %109
  %113 = vset.pattern.permute.xlu0 0
  %114 = vperm.xlu0 %113, %v84
  %v115 = vpop.permute.xlu0 %114
  %118 = vset.pattern.permute.xlu0 0
  %119 = vperm.xlu0 %118, %v85
  %v120 = vpop.permute.xlu0 %119
  %123 = vset.pattern.permute.xlu0 0
  %124 = vperm.xlu0 %123, %v86
  %v125 = vpop.permute.xlu0 %124
  %v127 = vmul.f32 %v78, %v90
  %v128 = vmul.f32 %v57, %v95
  %v129 = vmul.f32 %v59, %v100
  %v130 = vmul.f32 %v61, %v105
  %v131 = vmul.f32 %v63, %v110
  %v132 = vmul.f32 %v65, %v115
  %v133 = vmul.f32 %v67, %v120
  %v134 = vmul.f32 %v69, %v125
  %v135 = vmul.f32 %v22, 0.5
  %v136 = vmul.f32 %v23, 0.5
  %v137 = vmul.f32 %v24, 0.5
  %v138 = vmul.f32 %v25, 0.5
  %v139 = vmul.f32 %v26, 0.5
  %v140 = vmul.f32 %v27, 0.5
  %v141 = vmul.f32 %v28, 0.5
  %v142 = vmul.f32 %v29, 0.5
  %v143 = vmul.f32 %v22, 0.25
  %v144 = vmul.f32 %v23, 0.25
  %v145 = vmul.f32 %v24, 0.25
  %v146 = vmul.f32 %v25, 0.25
  %v147 = vmul.f32 %v26, 0.25
  %v148 = vmul.f32 %v27, 0.25
  %v149 = vmul.f32 %v28, 0.25
  %v150 = vmul.f32 %v29, 0.25
  %159 = vrot.lane.b32.xlu0 %v143, 112
  %v160 = vpop.permute.xlu0 %159
  %161 = vrot.lane.b32.xlu0 %v144, 112
  %v162 = vpop.permute.xlu0 %161
  %163 = vrot.lane.b32.xlu0 %v145, 112
  %v164 = vpop.permute.xlu0 %163
  %165 = vrot.lane.b32.xlu0 %v146, 112
  %v166 = vpop.permute.xlu0 %165
  %167 = vrot.lane.b32.xlu0 %v147, 112
  %v168 = vpop.permute.xlu0 %167
  %169 = vrot.lane.b32.xlu0 %v148, 112
  %v170 = vpop.permute.xlu0 %169
  %171 = vrot.lane.b32.xlu0 %v149, 112
  %v172 = vpop.permute.xlu0 %171
  %173 = vrot.lane.b32.xlu0 %v150, 112
  %v174 = vpop.permute.xlu0 %173
  %v183 = vadd.f32 %v135, %v160
  %v184 = vadd.f32 %v136, %v162
  %v185 = vadd.f32 %v137, %v164
  %v186 = vadd.f32 %v138, %v166
  %v187 = vadd.f32 %v139, %v168
  %v188 = vadd.f32 %v140, %v170
  %v189 = vadd.f32 %v141, %v172
  %v190 = vadd.f32 %v142, %v174
  %v191 = vmul.f32 %v127, 0.25
  %v192 = vmul.f32 %v128, 0.25
  %v193 = vmul.f32 %v129, 0.25
  %v194 = vmul.f32 %v130, 0.25
  %v195 = vmul.f32 %v131, 0.25
  %v196 = vmul.f32 %v132, 0.25
  %v197 = vmul.f32 %v133, 0.25
  %v198 = vmul.f32 %v134, 0.25
  %v199 = vadd.f32 %v183, %v191
  %v200 = vadd.f32 %v184, %v192
  %v201 = vadd.f32 %v185, %v193
  %v202 = vadd.f32 %v186, %v194
  %v203 = vadd.f32 %v187, %v195
  %v204 = vadd.f32 %v188, %v196
  %v205 = vadd.f32 %v189, %v197
  %v206 = vadd.f32 %v190, %v198
  %v207 = vld [vmem:[%s1] sm:$0xff]
  %v208 = vld [vmem:[%s1 + $0x8] sm:$0xff]
  %vm209 = vcmask 130048
  %v211 = vsel %vm209, %v199, 0
  %v214 = vsel %vm209, %v200, 0
  %v217 = vsel %vm209, %v201, 0
  %v220 = vsel %vm209, %v202, 0
  %v223 = vsel %vm209, %v203, 0
  %v226 = vsel %vm209, %v204, 0
  %v229 = vsel %vm209, %v205, 0
  %v232 = vsel %vm209, %v206, 0
  %234 = vmatprep.subr.mxu0 0.0
  %v235 = vand.u32 %v207, 4294901760
  %236 = vmatpush1.msra.mxu0 %v235
  %237 = vmatprep.subr.mxu0 0.0
  %v238 = vand.u32 %v208, 4294901760
  %239 = vmatpush1.msra.mxu0 %v238
  %240 = vmatprep.subr.mxu0 0.0
  %241 = vmatpush1.msra.mxu0 0.0
  %242 = vmatprep.subr.mxu0 0.0
  %243 = vmatpush1.msra.mxu0 0.0
  %244 = vmatprep.subr.mxu0 0.0
  %245 = vmatpush1.msra.mxu0 0.0
  %246 = vmatprep.subr.mxu0 0.0
  %247 = vmatpush1.msra.mxu0 0.0
  %248 = vmatprep.subr.mxu0 0.0
  %249 = vmatpush1.msra.mxu0 0.0
  %250 = vmatprep.subr.mxu0 0.0
  %251 = vmatpush1.msra.mxu0 0.0
  %252 = vmatprep.subr.mxu0 0.0
  %253 = vmatpush1.msra.mxu0 0.0
  %254 = vmatprep.subr.mxu0 0.0
  %255 = vmatpush1.msra.mxu0 0.0
  %256 = vmatprep.subr.mxu0 0.0
  %257 = vmatpush1.msra.mxu0 0.0
  %258 = vmatprep.subr.mxu0 0.0
  %259 = vmatpush1.msra.mxu0 0.0
  %260 = vmatprep.subr.mxu0 0.0
  %261 = vmatpush1.msra.mxu0 0.0
  %262 = vmatprep.subr.mxu0 0.0
  %263 = vmatpush1.msra.mxu0 0.0
  %264 = vmatprep.subr.mxu0 0.0
  %265 = vmatpush1.msra.mxu0 0.0
  %266 = vmatprep.subr.mxu0 0.0
  %267 = vmatpush1.msra.mxu0 0.0
  %268 = vmatprep.subr.mxu0 0.0
  %269 = vmatpush1.msra.mxu0 0.0
  %270 = vmatprep.subr.mxu0 0.0
  %271 = vmatpush1.msra.mxu0 0.0
  %272 = vmatprep.subr.mxu0 0.0
  %273 = vmatpush1.msra.mxu0 0.0
  %274 = vmatprep.subr.mxu0 0.0
  %275 = vmatpush1.msra.mxu0 0.0
  %276 = vmatprep.subr.mxu0 0.0
  %277 = vmatpush1.msra.mxu0 0.0
  %278 = vmatprep.subr.mxu0 0.0
  %279 = vmatpush1.msra.mxu0 0.0
  %280 = vmatprep.subr.mxu0 0.0
  %281 = vmatpush1.msra.mxu0 0.0
  %282 = vmatprep.subr.mxu0 0.0
  %283 = vmatpush1.msra.mxu0 0.0
  %284 = vmatprep.subr.mxu0 0.0
  %285 = vmatpush1.msra.mxu0 0.0
  %286 = vmatprep.subr.mxu0 0.0
  %287 = vmatpush1.msra.mxu0 0.0
  %288 = vmatprep.subr.mxu0 0.0
  %289 = vmatpush1.msra.mxu0 0.0
  %290 = vmatprep.subr.mxu0 0.0
  %291 = vmatpush1.msra.mxu0 0.0
  %292 = vmatprep.subr.mxu0 0.0
  %293 = vmatpush1.msra.mxu0 0.0
  %294 = vmatprep.subr.mxu0 0.0
  %295 = vmatpush1.msra.mxu0 0.0
  %296 = vmatprep.subr.mxu0 0.0
  %297 = vmatpush1.msra.mxu0 0.0
  %298 = vmatprep.subr.mxu0 0.0
  %299 = vmatpush1.msra.mxu0 0.0
  %300 = vmatprep.mubr.f32.mxu0 0.0
  %v301 = vand.u32 %v211, 4294901760
  %v302 = vsub.f32 %v211, %v301
  %v303 = vand.u32 %v302, 4294901760
  %v304 = vsub.f32 %v302, %v303
  %v305 = vand.u32 %v304, 4294901760
  %306 = vmatmul.mubr.f32.gmra.mrb[0].mxu0 %v305
  %v307 = vpop.f32.mrb[0].mxu0
  %v308 = vadd.f32 1e-12, %v307
  %v309 = vpop.f32.mrb[0].mxu0
  %310 = vmatprep.mubr.f32.mxu0 0.0
  %v311 = vand.u32 %v214, 4294901760
  %v312 = vsub.f32 %v214, %v311
  %v313 = vand.u32 %v312, 4294901760
  %v314 = vsub.f32 %v312, %v313
  %v315 = vand.u32 %v314, 4294901760
  %316 = vmatmul.mubr.f32.gmra.mrb[0].mxu0 %v315
  %v317 = vpop.f32.mrb[0].mxu0
  %v318 = vadd.f32 1e-12, %v317
  %v319 = vpop.f32.mrb[0].mxu0
  %320 = vmatprep.mubr.f32.mxu0 0.0
  %v321 = vand.u32 %v217, 4294901760
  %v322 = vsub.f32 %v217, %v321
  %v323 = vand.u32 %v322, 4294901760
  %v324 = vsub.f32 %v322, %v323
  %v325 = vand.u32 %v324, 4294901760
  %326 = vmatmul.mubr.f32.gmra.mrb[0].mxu0 %v325
  %v327 = vpop.f32.mrb[0].mxu0
  %v328 = vadd.f32 1e-12, %v327
  %v329 = vpop.f32.mrb[0].mxu0
  %330 = vmatprep.mubr.f32.mxu0 0.0
  %v331 = vand.u32 %v220, 4294901760
  %v332 = vsub.f32 %v220, %v331
  %v333 = vand.u32 %v332, 4294901760
  %v334 = vsub.f32 %v332, %v333
  %v335 = vand.u32 %v334, 4294901760
  %336 = vmatmul.mubr.f32.gmra.mrb[0].mxu0 %v335
  %v337 = vpop.f32.mrb[0].mxu0
  %v338 = vadd.f32 1e-12, %v337
  %v339 = vpop.f32.mrb[0].mxu0
  %340 = vmatprep.mubr.f32.mxu0 0.0
  %v341 = vand.u32 %v223, 4294901760
  %v342 = vsub.f32 %v223, %v341
  %v343 = vand.u32 %v342, 4294901760
  %v344 = vsub.f32 %v342, %v343
  %v345 = vand.u32 %v344, 4294901760
  %346 = vmatmul.mubr.f32.gmra.mrb[0].mxu0 %v345
  %v347 = vpop.f32.mrb[0].mxu0
  %v348 = vadd.f32 1e-12, %v347
  %v349 = vpop.f32.mrb[0].mxu0
  %350 = vmatprep.mubr.f32.mxu0 0.0
  %v351 = vand.u32 %v226, 4294901760
  %v352 = vsub.f32 %v226, %v351
  %v353 = vand.u32 %v352, 4294901760
  %v354 = vsub.f32 %v352, %v353
  %v355 = vand.u32 %v354, 4294901760
  %356 = vmatmul.mubr.f32.gmra.mrb[0].mxu0 %v355
  %v357 = vpop.f32.mrb[0].mxu0
  %v358 = vadd.f32 1e-12, %v357
  %v359 = vpop.f32.mrb[0].mxu0
  %360 = vmatprep.mubr.f32.mxu0 0.0
  %v361 = vand.u32 %v229, 4294901760
  %v362 = vsub.f32 %v229, %v361
  %v363 = vand.u32 %v362, 4294901760
  %v364 = vsub.f32 %v362, %v363
  %v365 = vand.u32 %v364, 4294901760
  %366 = vmatmul.mubr.f32.gmra.mrb[0].mxu0 %v365
  %v367 = vpop.f32.mrb[0].mxu0
  %v368 = vadd.f32 1e-12, %v367
  %v369 = vpop.f32.mrb[0].mxu0
  %370 = vmatprep.mubr.f32.mxu0 0.0
  %v371 = vand.u32 %v232, 4294901760
  %v372 = vsub.f32 %v232, %v371
  %v373 = vand.u32 %v372, 4294901760
  %v374 = vsub.f32 %v372, %v373
  %v375 = vand.u32 %v374, 4294901760
  %376 = vmatmul.mubr.f32.gmra.mrb[0].mxu0 %v375
  %v377 = vpop.f32.mrb[0].mxu0
  %v378 = vadd.f32 1e-12, %v377
  %v379 = vpop.f32.mrb[0].mxu0
  %380 = vdwg.mxu0
  %381 = vmatprep.subr.mxu0 0.0
  %v382 = vand.u32 %v207, 4294901760
  %v383 = vsub.f32 %v207, %v382
  %v384 = vand.u32 %v383, 4294901760
  %v385 = vsub.f32 %v383, %v384
  %v386 = vand.u32 %v385, 4294901760
  %387 = vmatpush1.msra.mxu0 %v386
  %388 = vmatprep.subr.mxu0 0.0
  %v389 = vand.u32 %v208, 4294901760
  %v390 = vsub.f32 %v208, %v389
  %v391 = vand.u32 %v390, 4294901760
  %v392 = vsub.f32 %v390, %v391
  %v393 = vand.u32 %v392, 4294901760
  %394 = vmatpush1.msra.mxu0 %v393
  %395 = vmatprep.subr.mxu0 0.0
  %396 = vmatpush1.msra.mxu0 0.0
  %397 = vmatprep.subr.mxu0 0.0
  %398 = vmatpush1.msra.mxu0 0.0
  %399 = vmatprep.subr.mxu0 0.0
  %400 = vmatpush1.msra.mxu0 0.0
  %401 = vmatprep.subr.mxu0 0.0
  %402 = vmatpush1.msra.mxu0 0.0
  %403 = vmatprep.subr.mxu0 0.0
  %404 = vmatpush1.msra.mxu0 0.0
  %405 = vmatprep.subr.mxu0 0.0
  %406 = vmatpush1.msra.mxu0 0.0
  %407 = vmatprep.subr.mxu0 0.0
  %408 = vmatpush1.msra.mxu0 0.0
  %409 = vmatprep.subr.mxu0 0.0
  %410 = vmatpush1.msra.mxu0 0.0
  %411 = vmatprep.subr.mxu0 0.0
  %412 = vmatpush1.msra.mxu0 0.0
  %413 = vmatprep.subr.mxu0 0.0
  %414 = vmatpush1.msra.mxu0 0.0
  %415 = vmatprep.subr.mxu0 0.0
  %416 = vmatpush1.msra.mxu0 0.0
  %417 = vmatprep.subr.mxu0 0.0
  %418 = vmatpush1.msra.mxu0 0.0
  %419 = vmatprep.subr.mxu0 0.0
  %420 = vmatpush1.msra.mxu0 0.0
  %421 = vmatprep.subr.mxu0 0.0
  %422 = vmatpush1.msra.mxu0 0.0
  %423 = vmatprep.subr.mxu0 0.0
  %424 = vmatpush1.msra.mxu0 0.0
  %425 = vmatprep.subr.mxu0 0.0
  %426 = vmatpush1.msra.mxu0 0.0
  %427 = vmatprep.subr.mxu0 0.0
  %428 = vmatpush1.msra.mxu0 0.0
  %429 = vmatprep.subr.mxu0 0.0
  %430 = vmatpush1.msra.mxu0 0.0
  %431 = vmatprep.subr.mxu0 0.0
  %432 = vmatpush1.msra.mxu0 0.0
  %433 = vmatprep.subr.mxu0 0.0
  %434 = vmatpush1.msra.mxu0 0.0
  %435 = vmatprep.subr.mxu0 0.0
  %436 = vmatpush1.msra.mxu0 0.0
  %437 = vmatprep.subr.mxu0 0.0
  %438 = vmatpush1.msra.mxu0 0.0
  %439 = vmatprep.subr.mxu0 0.0
  %440 = vmatpush1.msra.mxu0 0.0
  %441 = vmatprep.subr.mxu0 0.0
  %442 = vmatpush1.msra.mxu0 0.0
  %443 = vmatprep.subr.mxu0 0.0
  %444 = vmatpush1.msra.mxu0 0.0
  %445 = vmatprep.subr.mxu0 0.0
  %446 = vmatpush1.msra.mxu0 0.0
  %447 = vmatprep.subr.mxu0 0.0
  %448 = vmatpush1.msra.mxu0 0.0
  %449 = vmatprep.subr.mxu0 0.0
  %450 = vmatpush1.msra.mxu0 0.0
  %451 = vmatprep.subr.mxu0 0.0
  %452 = vmatpush1.msra.mxu0 0.0
  %453 = vmatprep.subr.mxu0 0.0
  %454 = vmatpush1.msra.mxu0 0.0
  %455 = vmatprep.mubr.f32.mxu0 0.0
  %v456 = vand.u32 %v211, 4294901760
  %457 = vmatmul.mubr.f32.gmra.mrb[0].mxu0 %v456
  %v458 = vpop.f32.mrb[0].mxu0
  %v459 = vadd.f32 %v308, %v458
  %v460 = vpop.f32.mrb[0].mxu0
  %461 = vmatprep.mubr.f32.mxu0 0.0
  %v462 = vand.u32 %v214, 4294901760
  %463 = vmatmul.mubr.f32.gmra.mrb[0].mxu0 %v462
  %v464 = vpop.f32.mrb[0].mxu0
  %v465 = vadd.f32 %v318, %v464
  %v466 = vpop.f32.mrb[0].mxu0
  %467 = vmatprep.mubr.f32.mxu0 0.0
  %v468 = vand.u32 %v217, 4294901760
  %469 = vmatmul.mubr.f32.gmra.mrb[0].mxu0 %v468
  %v470 = vpop.f32.mrb[0].mxu0
  %v471 = vadd.f32 %v328, %v470
  %v472 = vpop.f32.mrb[0].mxu0
  %473 = vmatprep.mubr.f32.mxu0 0.0
  %v474 = vand.u32 %v220, 4294901760
  %475 = vmatmul.mubr.f32.gmra.mrb[0].mxu0 %v474
  %v476 = vpop.f32.mrb[0].mxu0
  %v477 = vadd.f32 %v338, %v476
  %v478 = vpop.f32.mrb[0].mxu0
  %479 = vmatprep.mubr.f32.mxu0 0.0
  %v480 = vand.u32 %v223, 4294901760
  %481 = vmatmul.mubr.f32.gmra.mrb[0].mxu0 %v480
  %v482 = vpop.f32.mrb[0].mxu0
  %v483 = vadd.f32 %v348, %v482
  %v484 = vpop.f32.mrb[0].mxu0
  %485 = vmatprep.mubr.f32.mxu0 0.0
  %v486 = vand.u32 %v226, 4294901760
  %487 = vmatmul.mubr.f32.gmra.mrb[0].mxu0 %v486
  %v488 = vpop.f32.mrb[0].mxu0
  %v489 = vadd.f32 %v358, %v488
  %v490 = vpop.f32.mrb[0].mxu0
  %491 = vmatprep.mubr.f32.mxu0 0.0
  %v492 = vand.u32 %v229, 4294901760
  %493 = vmatmul.mubr.f32.gmra.mrb[0].mxu0 %v492
  %v494 = vpop.f32.mrb[0].mxu0
  %v495 = vadd.f32 %v368, %v494
  %v496 = vpop.f32.mrb[0].mxu0
  %497 = vmatprep.mubr.f32.mxu0 0.0
  %v498 = vand.u32 %v232, 4294901760
  %499 = vmatmul.mubr.f32.gmra.mrb[0].mxu0 %v498
  %v500 = vpop.f32.mrb[0].mxu0
  %v501 = vadd.f32 %v378, %v500
  %v502 = vpop.f32.mrb[0].mxu0
  %503 = vdwg.mxu0
  %504 = vmatprep.subr.mxu0 0.0
  %v505 = vand.u32 %v207, 4294901760
  %v506 = vsub.f32 %v207, %v505
  %507 = vmatpush1.msra.mxu0 %v506
  %508 = vmatprep.subr.mxu0 0.0
  %v509 = vand.u32 %v208, 4294901760
  %v510 = vsub.f32 %v208, %v509
  %511 = vmatpush1.msra.mxu0 %v510
  %512 = vmatprep.subr.mxu0 0.0
  %513 = vmatpush1.msra.mxu0 0.0
  %514 = vmatprep.subr.mxu0 0.0
  %515 = vmatpush1.msra.mxu0 0.0
  %516 = vmatprep.subr.mxu0 0.0
  %517 = vmatpush1.msra.mxu0 0.0
  %518 = vmatprep.subr.mxu0 0.0
  %519 = vmatpush1.msra.mxu0 0.0
  %520 = vmatprep.subr.mxu0 0.0
  %521 = vmatpush1.msra.mxu0 0.0
  %522 = vmatprep.subr.mxu0 0.0
  %523 = vmatpush1.msra.mxu0 0.0
  %524 = vmatprep.subr.mxu0 0.0
  %525 = vmatpush1.msra.mxu0 0.0
  %526 = vmatprep.subr.mxu0 0.0
  %527 = vmatpush1.msra.mxu0 0.0
  %528 = vmatprep.subr.mxu0 0.0
  %529 = vmatpush1.msra.mxu0 0.0
  %530 = vmatprep.subr.mxu0 0.0
  %531 = vmatpush1.msra.mxu0 0.0
  %532 = vmatprep.subr.mxu0 0.0
  %533 = vmatpush1.msra.mxu0 0.0
  %534 = vmatprep.subr.mxu0 0.0
  %535 = vmatpush1.msra.mxu0 0.0
  %536 = vmatprep.subr.mxu0 0.0
  %537 = vmatpush1.msra.mxu0 0.0
  %538 = vmatprep.subr.mxu0 0.0
  %539 = vmatpush1.msra.mxu0 0.0
  %540 = vmatprep.subr.mxu0 0.0
  %541 = vmatpush1.msra.mxu0 0.0
  %542 = vmatprep.subr.mxu0 0.0
  %543 = vmatpush1.msra.mxu0 0.0
  %544 = vmatprep.subr.mxu0 0.0
  %545 = vmatpush1.msra.mxu0 0.0
  %546 = vmatprep.subr.mxu0 0.0
  %547 = vmatpush1.msra.mxu0 0.0
  %548 = vmatprep.subr.mxu0 0.0
  %549 = vmatpush1.msra.mxu0 0.0
  %550 = vmatprep.subr.mxu0 0.0
  %551 = vmatpush1.msra.mxu0 0.0
  %552 = vmatprep.subr.mxu0 0.0
  %553 = vmatpush1.msra.mxu0 0.0
  %554 = vmatprep.subr.mxu0 0.0
  %555 = vmatpush1.msra.mxu0 0.0
  %556 = vmatprep.subr.mxu0 0.0
  %557 = vmatpush1.msra.mxu0 0.0
  %558 = vmatprep.subr.mxu0 0.0
  %559 = vmatpush1.msra.mxu0 0.0
  %560 = vmatprep.subr.mxu0 0.0
  %561 = vmatpush1.msra.mxu0 0.0
  %562 = vmatprep.subr.mxu0 0.0
  %563 = vmatpush1.msra.mxu0 0.0
  %564 = vmatprep.subr.mxu0 0.0
  %565 = vmatpush1.msra.mxu0 0.0
  %566 = vmatprep.subr.mxu0 0.0
  %567 = vmatpush1.msra.mxu0 0.0
  %568 = vmatprep.subr.mxu0 0.0
  %569 = vmatpush1.msra.mxu0 0.0
  %570 = vmatprep.subr.mxu0 0.0
  %571 = vmatpush1.msra.mxu0 0.0
  %572 = vmatprep.mubr.f32.mxu0 0.0
  %v573 = vand.u32 %v211, 4294901760
  %v574 = vsub.f32 %v211, %v573
  %575 = vmatmul.mubr.f32.gmra.mrb[0].mxu0 %v574
  %v576 = vpop.f32.mrb[0].mxu0
  %v577 = vadd.f32 %v459, %v576
  %v578 = vpop.f32.mrb[0].mxu0
  %579 = vmatprep.mubr.f32.mxu0 0.0
  %v580 = vand.u32 %v214, 4294901760
  %v581 = vsub.f32 %v214, %v580
  %582 = vmatmul.mubr.f32.gmra.mrb[0].mxu0 %v581
  %v583 = vpop.f32.mrb[0].mxu0
  %v584 = vadd.f32 %v465, %v583
  %v585 = vpop.f32.mrb[0].mxu0
  %586 = vmatprep.mubr.f32.mxu0 0.0
  %v587 = vand.u32 %v217, 4294901760
  %v588 = vsub.f32 %v217, %v587
  %589 = vmatmul.mubr.f32.gmra.mrb[0].mxu0 %v588
  %v590 = vpop.f32.mrb[0].mxu0
  %v591 = vadd.f32 %v471, %v590
  %v592 = vpop.f32.mrb[0].mxu0
  %593 = vmatprep.mubr.f32.mxu0 0.0
  %v594 = vand.u32 %v220, 4294901760
  %v595 = vsub.f32 %v220, %v594
  %596 = vmatmul.mubr.f32.gmra.mrb[0].mxu0 %v595
  %v597 = vpop.f32.mrb[0].mxu0
  %v598 = vadd.f32 %v477, %v597
  %v599 = vpop.f32.mrb[0].mxu0
  %600 = vmatprep.mubr.f32.mxu0 0.0
  %v601 = vand.u32 %v223, 4294901760
  %v602 = vsub.f32 %v223, %v601
  %603 = vmatmul.mubr.f32.gmra.mrb[0].mxu0 %v602
  %v604 = vpop.f32.mrb[0].mxu0
  %v605 = vadd.f32 %v483, %v604
  %v606 = vpop.f32.mrb[0].mxu0
  %607 = vmatprep.mubr.f32.mxu0 0.0
  %v608 = vand.u32 %v226, 4294901760
  %v609 = vsub.f32 %v226, %v608
  %610 = vmatmul.mubr.f32.gmra.mrb[0].mxu0 %v609
  %v611 = vpop.f32.mrb[0].mxu0
  %v612 = vadd.f32 %v489, %v611
  %v613 = vpop.f32.mrb[0].mxu0
  %614 = vmatprep.mubr.f32.mxu0 0.0
  %v615 = vand.u32 %v229, 4294901760
  %v616 = vsub.f32 %v229, %v615
  %617 = vmatmul.mubr.f32.gmra.mrb[0].mxu0 %v616
  %v618 = vpop.f32.mrb[0].mxu0
  %v619 = vadd.f32 %v495, %v618
  %v620 = vpop.f32.mrb[0].mxu0
  %621 = vmatprep.mubr.f32.mxu0 0.0
  %v622 = vand.u32 %v232, 4294901760
  %v623 = vsub.f32 %v232, %v622
  %624 = vmatmul.mubr.f32.gmra.mrb[0].mxu0 %v623
  %v625 = vpop.f32.mrb[0].mxu0
  %v626 = vadd.f32 %v501, %v625
  %v627 = vpop.f32.mrb[0].mxu0
  %628 = vdwg.mxu0
  %629 = vmatprep.subr.mxu0 0.0
  %v630 = vand.u32 %v207, 4294901760
  %631 = vmatpush1.msra.mxu0 %v630
  %632 = vmatprep.subr.mxu0 0.0
  %v633 = vand.u32 %v208, 4294901760
  %634 = vmatpush1.msra.mxu0 %v633
  %635 = vmatprep.subr.mxu0 0.0
  %636 = vmatpush1.msra.mxu0 0.0
  %637 = vmatprep.subr.mxu0 0.0
  %638 = vmatpush1.msra.mxu0 0.0
  %639 = vmatprep.subr.mxu0 0.0
  %640 = vmatpush1.msra.mxu0 0.0
  %641 = vmatprep.subr.mxu0 0.0
  %642 = vmatpush1.msra.mxu0 0.0
  %643 = vmatprep.subr.mxu0 0.0
  %644 = vmatpush1.msra.mxu0 0.0
  %645 = vmatprep.subr.mxu0 0.0
  %646 = vmatpush1.msra.mxu0 0.0
  %647 = vmatprep.subr.mxu0 0.0
  %648 = vmatpush1.msra.mxu0 0.0
  %649 = vmatprep.subr.mxu0 0.0
  %650 = vmatpush1.msra.mxu0 0.0
  %651 = vmatprep.subr.mxu0 0.0
  %652 = vmatpush1.msra.mxu0 0.0
  %653 = vmatprep.subr.mxu0 0.0
  %654 = vmatpush1.msra.mxu0 0.0
  %655 = vmatprep.subr.mxu0 0.0
  %656 = vmatpush1.msra.mxu0 0.0
  %657 = vmatprep.subr.mxu0 0.0
  %658 = vmatpush1.msra.mxu0 0.0
  %659 = vmatprep.subr.mxu0 0.0
  %660 = vmatpush1.msra.mxu0 0.0
  %661 = vmatprep.subr.mxu0 0.0
  %662 = vmatpush1.msra.mxu0 0.0
  %663 = vmatprep.subr.mxu0 0.0
  %664 = vmatpush1.msra.mxu0 0.0
  %665 = vmatprep.subr.mxu0 0.0
  %666 = vmatpush1.msra.mxu0 0.0
  %667 = vmatprep.subr.mxu0 0.0
  %668 = vmatpush1.msra.mxu0 0.0
  %669 = vmatprep.subr.mxu0 0.0
  %670 = vmatpush1.msra.mxu0 0.0
  %671 = vmatprep.subr.mxu0 0.0
  %672 = vmatpush1.msra.mxu0 0.0
  %673 = vmatprep.subr.mxu0 0.0
  %674 = vmatpush1.msra.mxu0 0.0
  %675 = vmatprep.subr.mxu0 0.0
  %676 = vmatpush1.msra.mxu0 0.0
  %677 = vmatprep.subr.mxu0 0.0
  %678 = vmatpush1.msra.mxu0 0.0
  %679 = vmatprep.subr.mxu0 0.0
  %680 = vmatpush1.msra.mxu0 0.0
  %681 = vmatprep.subr.mxu0 0.0
  %682 = vmatpush1.msra.mxu0 0.0
  %683 = vmatprep.subr.mxu0 0.0
  %684 = vmatpush1.msra.mxu0 0.0
  %685 = vmatprep.subr.mxu0 0.0
  %686 = vmatpush1.msra.mxu0 0.0
  %687 = vmatprep.subr.mxu0 0.0
  %688 = vmatpush1.msra.mxu0 0.0
  %689 = vmatprep.subr.mxu0 0.0
  %690 = vmatpush1.msra.mxu0 0.0
  %691 = vmatprep.subr.mxu0 0.0
  %692 = vmatpush1.msra.mxu0 0.0
  %693 = vmatprep.subr.mxu0 0.0
  %694 = vmatpush1.msra.mxu0 0.0
  %695 = vmatprep.mubr.f32.mxu0 0.0
  %v696 = vand.u32 %v211, 4294901760
  %v697 = vsub.f32 %v211, %v696
  %v698 = vand.u32 %v697, 4294901760
  %699 = vmatmul.mubr.f32.gmra.mrb[0].mxu0 %v698
  %v700 = vpop.f32.mrb[0].mxu0
  %v701 = vadd.f32 %v577, %v700
  %v702 = vpop.f32.mrb[0].mxu0
  %703 = vmatprep.mubr.f32.mxu0 0.0
  %v704 = vand.u32 %v214, 4294901760
  %v705 = vsub.f32 %v214, %v704
  %v706 = vand.u32 %v705, 4294901760
  %707 = vmatmul.mubr.f32.gmra.mrb[0].mxu0 %v706
  %v708 = vpop.f32.mrb[0].mxu0
  %v709 = vadd.f32 %v584, %v708
  %v710 = vpop.f32.mrb[0].mxu0
  %711 = vmatprep.mubr.f32.mxu0 0.0
  %v712 = vand.u32 %v217, 4294901760
  %v713 = vsub.f32 %v217, %v712
  %v714 = vand.u32 %v713, 4294901760
  %715 = vmatmul.mubr.f32.gmra.mrb[0].mxu0 %v714
  %v716 = vpop.f32.mrb[0].mxu0
  %v717 = vadd.f32 %v591, %v716
  %v718 = vpop.f32.mrb[0].mxu0
  %719 = vmatprep.mubr.f32.mxu0 0.0
  %v720 = vand.u32 %v220, 4294901760
  %v721 = vsub.f32 %v220, %v720
  %v722 = vand.u32 %v721, 4294901760
  %723 = vmatmul.mubr.f32.gmra.mrb[0].mxu0 %v722
  %v724 = vpop.f32.mrb[0].mxu0
  %v725 = vadd.f32 %v598, %v724
  %v726 = vpop.f32.mrb[0].mxu0
  %727 = vmatprep.mubr.f32.mxu0 0.0
  %v728 = vand.u32 %v223, 4294901760
  %v729 = vsub.f32 %v223, %v728
  %v730 = vand.u32 %v729, 4294901760
  %731 = vmatmul.mubr.f32.gmra.mrb[0].mxu0 %v730
  %v732 = vpop.f32.mrb[0].mxu0
  %v733 = vadd.f32 %v605, %v732
  %v734 = vpop.f32.mrb[0].mxu0
  %735 = vmatprep.mubr.f32.mxu0 0.0
  %v736 = vand.u32 %v226, 4294901760
  %v737 = vsub.f32 %v226, %v736
  %v738 = vand.u32 %v737, 4294901760
  %739 = vmatmul.mubr.f32.gmra.mrb[0].mxu0 %v738
  %v740 = vpop.f32.mrb[0].mxu0
  %v741 = vadd.f32 %v612, %v740
  %v742 = vpop.f32.mrb[0].mxu0
  %743 = vmatprep.mubr.f32.mxu0 0.0
  %v744 = vand.u32 %v229, 4294901760
  %v745 = vsub.f32 %v229, %v744
  %v746 = vand.u32 %v745, 4294901760
  %747 = vmatmul.mubr.f32.gmra.mrb[0].mxu0 %v746
  %v748 = vpop.f32.mrb[0].mxu0
  %v749 = vadd.f32 %v619, %v748
  %v750 = vpop.f32.mrb[0].mxu0
  %751 = vmatprep.mubr.f32.mxu0 0.0
  %v752 = vand.u32 %v232, 4294901760
  %v753 = vsub.f32 %v232, %v752
  %v754 = vand.u32 %v753, 4294901760
  %755 = vmatmul.mubr.f32.gmra.mrb[0].mxu0 %v754
  %v756 = vpop.f32.mrb[0].mxu0
  %v757 = vadd.f32 %v626, %v756
  %v758 = vpop.f32.mrb[0].mxu0
  %759 = vdwg.mxu0
  %760 = vmatprep.subr.mxu0 0.0
  %v761 = vand.u32 %v207, 4294901760
  %v762 = vsub.f32 %v207, %v761
  %v763 = vand.u32 %v762, 4294901760
  %764 = vmatpush1.msra.mxu0 %v763
  %765 = vmatprep.subr.mxu0 0.0
  %v766 = vand.u32 %v208, 4294901760
  %v767 = vsub.f32 %v208, %v766
  %v768 = vand.u32 %v767, 4294901760
  %769 = vmatpush1.msra.mxu0 %v768
  %770 = vmatprep.subr.mxu0 0.0
  %771 = vmatpush1.msra.mxu0 0.0
  %772 = vmatprep.subr.mxu0 0.0
  %773 = vmatpush1.msra.mxu0 0.0
  %774 = vmatprep.subr.mxu0 0.0
  %775 = vmatpush1.msra.mxu0 0.0
  %776 = vmatprep.subr.mxu0 0.0
  %777 = vmatpush1.msra.mxu0 0.0
  %778 = vmatprep.subr.mxu0 0.0
  %779 = vmatpush1.msra.mxu0 0.0
  %780 = vmatprep.subr.mxu0 0.0
  %781 = vmatpush1.msra.mxu0 0.0
  %782 = vmatprep.subr.mxu0 0.0
  %783 = vmatpush1.msra.mxu0 0.0
  %784 = vmatprep.subr.mxu0 0.0
  %785 = vmatpush1.msra.mxu0 0.0
  %786 = vmatprep.subr.mxu0 0.0
  %787 = vmatpush1.msra.mxu0 0.0
  %788 = vmatprep.subr.mxu0 0.0
  %789 = vmatpush1.msra.mxu0 0.0
  %790 = vmatprep.subr.mxu0 0.0
  %791 = vmatpush1.msra.mxu0 0.0
  %792 = vmatprep.subr.mxu0 0.0
  %793 = vmatpush1.msra.mxu0 0.0
  %794 = vmatprep.subr.mxu0 0.0
  %795 = vmatpush1.msra.mxu0 0.0
  %796 = vmatprep.subr.mxu0 0.0
  %797 = vmatpush1.msra.mxu0 0.0
  %798 = vmatprep.subr.mxu0 0.0
  %799 = vmatpush1.msra.mxu0 0.0
  %800 = vmatprep.subr.mxu0 0.0
  %801 = vmatpush1.msra.mxu0 0.0
  %802 = vmatprep.subr.mxu0 0.0
  %803 = vmatpush1.msra.mxu0 0.0
  %804 = vmatprep.subr.mxu0 0.0
  %805 = vmatpush1.msra.mxu0 0.0
  %806 = vmatprep.subr.mxu0 0.0
  %807 = vmatpush1.msra.mxu0 0.0
  %808 = vmatprep.subr.mxu0 0.0
  %809 = vmatpush1.msra.mxu0 0.0
  %810 = vmatprep.subr.mxu0 0.0
  %811 = vmatpush1.msra.mxu0 0.0
  %812 = vmatprep.subr.mxu0 0.0
  %813 = vmatpush1.msra.mxu0 0.0
  %814 = vmatprep.subr.mxu0 0.0
  %815 = vmatpush1.msra.mxu0 0.0
  %816 = vmatprep.subr.mxu0 0.0
  %817 = vmatpush1.msra.mxu0 0.0
  %818 = vmatprep.subr.mxu0 0.0
  %819 = vmatpush1.msra.mxu0 0.0
  %820 = vmatprep.subr.mxu0 0.0
  %821 = vmatpush1.msra.mxu0 0.0
  %822 = vmatprep.subr.mxu0 0.0
  %823 = vmatpush1.msra.mxu0 0.0
  %824 = vmatprep.subr.mxu0 0.0
  %825 = vmatpush1.msra.mxu0 0.0
  %826 = vmatprep.subr.mxu0 0.0
  %827 = vmatpush1.msra.mxu0 0.0
  %828 = vmatprep.subr.mxu0 0.0
  %829 = vmatpush1.msra.mxu0 0.0
  %830 = vmatprep.mubr.f32.mxu0 0.0
  %v831 = vand.u32 %v211, 4294901760
  %832 = vmatmul.mubr.f32.gmra.mrb[0].mxu0 %v831
  %v833 = vpop.f32.mrb[0].mxu0
  %v834 = vadd.f32 %v701, %v833
  %v835 = vpop.f32.mrb[0].mxu0
  %836 = vmatprep.mubr.f32.mxu0 0.0
  %v837 = vand.u32 %v214, 4294901760
  %838 = vmatmul.mubr.f32.gmra.mrb[0].mxu0 %v837
  %v839 = vpop.f32.mrb[0].mxu0
  %v840 = vadd.f32 %v709, %v839
  %v841 = vpop.f32.mrb[0].mxu0
  %842 = vmatprep.mubr.f32.mxu0 0.0
  %v843 = vand.u32 %v217, 4294901760
  %844 = vmatmul.mubr.f32.gmra.mrb[0].mxu0 %v843
  %v845 = vpop.f32.mrb[0].mxu0
  %v846 = vadd.f32 %v717, %v845
  %v847 = vpop.f32.mrb[0].mxu0
  %848 = vmatprep.mubr.f32.mxu0 0.0
  %v849 = vand.u32 %v220, 4294901760
  %850 = vmatmul.mubr.f32.gmra.mrb[0].mxu0 %v849
  %v851 = vpop.f32.mrb[0].mxu0
  %v852 = vadd.f32 %v725, %v851
  %v853 = vpop.f32.mrb[0].mxu0
  %854 = vmatprep.mubr.f32.mxu0 0.0
  %v855 = vand.u32 %v223, 4294901760
  %856 = vmatmul.mubr.f32.gmra.mrb[0].mxu0 %v855
  %v857 = vpop.f32.mrb[0].mxu0
  %v858 = vadd.f32 %v733, %v857
  %v859 = vpop.f32.mrb[0].mxu0
  %860 = vmatprep.mubr.f32.mxu0 0.0
  %v861 = vand.u32 %v226, 4294901760
  %862 = vmatmul.mubr.f32.gmra.mrb[0].mxu0 %v861
  %v863 = vpop.f32.mrb[0].mxu0
  %v864 = vadd.f32 %v741, %v863
  %v865 = vpop.f32.mrb[0].mxu0
  %866 = vmatprep.mubr.f32.mxu0 0.0
  %v867 = vand.u32 %v229, 4294901760
  %868 = vmatmul.mubr.f32.gmra.mrb[0].mxu0 %v867
  %v869 = vpop.f32.mrb[0].mxu0
  %v870 = vadd.f32 %v749, %v869
  %v871 = vpop.f32.mrb[0].mxu0
  %872 = vmatprep.mubr.f32.mxu0 0.0
  %v873 = vand.u32 %v232, 4294901760
  %874 = vmatmul.mubr.f32.gmra.mrb[0].mxu0 %v873
  %v875 = vpop.f32.mrb[0].mxu0
  %v876 = vadd.f32 %v757, %v875
  %v877 = vpop.f32.mrb[0].mxu0
  %878 = vdwg.mxu0
  %879 = vmatprep.subr.mxu0 0.0
  %v880 = vand.u32 %v207, 4294901760
  %881 = vmatpush1.msra.mxu0 %v880
  %882 = vmatprep.subr.mxu0 0.0
  %v883 = vand.u32 %v208, 4294901760
  %884 = vmatpush1.msra.mxu0 %v883
  %885 = vmatprep.subr.mxu0 0.0
  %886 = vmatpush1.msra.mxu0 0.0
  %887 = vmatprep.subr.mxu0 0.0
  %888 = vmatpush1.msra.mxu0 0.0
  %889 = vmatprep.subr.mxu0 0.0
  %890 = vmatpush1.msra.mxu0 0.0
  %891 = vmatprep.subr.mxu0 0.0
  %892 = vmatpush1.msra.mxu0 0.0
  %893 = vmatprep.subr.mxu0 0.0
  %894 = vmatpush1.msra.mxu0 0.0
  %895 = vmatprep.subr.mxu0 0.0
  %896 = vmatpush1.msra.mxu0 0.0
  %897 = vmatprep.subr.mxu0 0.0
  %898 = vmatpush1.msra.mxu0 0.0
  %899 = vmatprep.subr.mxu0 0.0
  %900 = vmatpush1.msra.mxu0 0.0
  %901 = vmatprep.subr.mxu0 0.0
  %902 = vmatpush1.msra.mxu0 0.0
  %903 = vmatprep.subr.mxu0 0.0
  %904 = vmatpush1.msra.mxu0 0.0
  %905 = vmatprep.subr.mxu0 0.0
  %906 = vmatpush1.msra.mxu0 0.0
  %907 = vmatprep.subr.mxu0 0.0
  %908 = vmatpush1.msra.mxu0 0.0
  %909 = vmatprep.subr.mxu0 0.0
  %910 = vmatpush1.msra.mxu0 0.0
  %911 = vmatprep.subr.mxu0 0.0
  %912 = vmatpush1.msra.mxu0 0.0
  %913 = vmatprep.subr.mxu0 0.0
  %914 = vmatpush1.msra.mxu0 0.0
  %915 = vmatprep.subr.mxu0 0.0
  %916 = vmatpush1.msra.mxu0 0.0
  %917 = vmatprep.subr.mxu0 0.0
  %918 = vmatpush1.msra.mxu0 0.0
  %919 = vmatprep.subr.mxu0 0.0
  %920 = vmatpush1.msra.mxu0 0.0
  %921 = vmatprep.subr.mxu0 0.0
  %922 = vmatpush1.msra.mxu0 0.0
  %923 = vmatprep.subr.mxu0 0.0
  %924 = vmatpush1.msra.mxu0 0.0
  %925 = vmatprep.subr.mxu0 0.0
  %926 = vmatpush1.msra.mxu0 0.0
  %927 = vmatprep.subr.mxu0 0.0
  %928 = vmatpush1.msra.mxu0 0.0
  %929 = vmatprep.subr.mxu0 0.0
  %930 = vmatpush1.msra.mxu0 0.0
  %931 = vmatprep.subr.mxu0 0.0
  %932 = vmatpush1.msra.mxu0 0.0
  %933 = vmatprep.subr.mxu0 0.0
  %934 = vmatpush1.msra.mxu0 0.0
  %935 = vmatprep.subr.mxu0 0.0
  %936 = vmatpush1.msra.mxu0 0.0
  %937 = vmatprep.subr.mxu0 0.0
  %938 = vmatpush1.msra.mxu0 0.0
  %939 = vmatprep.subr.mxu0 0.0
  %940 = vmatpush1.msra.mxu0 0.0
  %941 = vmatprep.subr.mxu0 0.0
  %942 = vmatpush1.msra.mxu0 0.0
  %943 = vmatprep.subr.mxu0 0.0
  %944 = vmatpush1.msra.mxu0 0.0
  %945 = vmatprep.mubr.f32.mxu0 0.0
  %v946 = vand.u32 %v211, 4294901760
  %947 = vmatmul.mubr.f32.gmra.mrb[0].mxu0 %v946
  %v948 = vpop.f32.mrb[0].mxu0
  %v949 = vadd.f32 %v834, %v948
  %v950 = vpop.f32.mrb[0].mxu0
  %951 = vmatprep.mubr.f32.mxu0 0.0
  %v952 = vand.u32 %v214, 4294901760
  %953 = vmatmul.mubr.f32.gmra.mrb[0].mxu0 %v952
  %v954 = vpop.f32.mrb[0].mxu0
  %v955 = vadd.f32 %v840, %v954
  %v956 = vpop.f32.mrb[0].mxu0
  %957 = vmatprep.mubr.f32.mxu0 0.0
  %v958 = vand.u32 %v217, 4294901760
  %959 = vmatmul.mubr.f32.gmra.mrb[0].mxu0 %v958
  %v960 = vpop.f32.mrb[0].mxu0
  %v961 = vadd.f32 %v846, %v960
  %v962 = vpop.f32.mrb[0].mxu0
  %963 = vmatprep.mubr.f32.mxu0 0.0
  %v964 = vand.u32 %v220, 4294901760
  %965 = vmatmul.mubr.f32.gmra.mrb[0].mxu0 %v964
  %v966 = vpop.f32.mrb[0].mxu0
  %v967 = vadd.f32 %v852, %v966
  %v968 = vpop.f32.mrb[0].mxu0
  %969 = vmatprep.mubr.f32.mxu0 0.0
  %v970 = vand.u32 %v223, 4294901760
  %971 = vmatmul.mubr.f32.gmra.mrb[0].mxu0 %v970
  %v972 = vpop.f32.mrb[0].mxu0
  %v973 = vadd.f32 %v858, %v972
  %v974 = vpop.f32.mrb[0].mxu0
  %975 = vmatprep.mubr.f32.mxu0 0.0
  %v976 = vand.u32 %v226, 4294901760
  %977 = vmatmul.mubr.f32.gmra.mrb[0].mxu0 %v976
  %v978 = vpop.f32.mrb[0].mxu0
  %v979 = vadd.f32 %v864, %v978
  %v980 = vpop.f32.mrb[0].mxu0
  %981 = vmatprep.mubr.f32.mxu0 0.0
  %v982 = vand.u32 %v229, 4294901760
  %983 = vmatmul.mubr.f32.gmra.mrb[0].mxu0 %v982
  %v984 = vpop.f32.mrb[0].mxu0
  %v985 = vadd.f32 %v870, %v984
  %v986 = vpop.f32.mrb[0].mxu0
  %987 = vmatprep.mubr.f32.mxu0 0.0
  %v988 = vand.u32 %v232, 4294901760
  %989 = vmatmul.mubr.f32.gmra.mrb[0].mxu0 %v988
  %v990 = vpop.f32.mrb[0].mxu0
  %v991 = vadd.f32 %v876, %v990
  %v992 = vpop.f32.mrb[0].mxu0
  %993 = vdwg.mxu0
  %v994 = vrsqrt.pop %v949
  %v995 = vmul.f32 %v949, %v994
  %vm996 = vcmp.eq.f32.partialorder %v949, inf
  %v997 = vsel %vm996, %v949, %v995
  %vm998 = vcmp.eq.f32.partialorder %v949, 0.0
  %v999 = vand.u32 %v949, 2147483648
  %v1000 = vsel %vm998, %v999, %v997
  %v1001 = vrsqrt.pop %v955
  %v1002 = vmul.f32 %v955, %v1001
  %vm1003 = vcmp.eq.f32.partialorder %v955, inf
  %v1004 = vsel %vm1003, %v955, %v1002
  %vm1005 = vcmp.eq.f32.partialorder %v955, 0.0
  %v1006 = vand.u32 %v955, 2147483648
  %v1007 = vsel %vm1005, %v1006, %v1004
  %v1008 = vrsqrt.pop %v961
  %v1009 = vmul.f32 %v961, %v1008
  %vm1010 = vcmp.eq.f32.partialorder %v961, inf
  %v1011 = vsel %vm1010, %v961, %v1009
  %vm1012 = vcmp.eq.f32.partialorder %v961, 0.0
  %v1013 = vand.u32 %v961, 2147483648
  %v1014 = vsel %vm1012, %v1013, %v1011
  %v1015 = vrsqrt.pop %v967
  %v1016 = vmul.f32 %v967, %v1015
  %vm1017 = vcmp.eq.f32.partialorder %v967, inf
  %v1018 = vsel %vm1017, %v967, %v1016
  %vm1019 = vcmp.eq.f32.partialorder %v967, 0.0
  %v1020 = vand.u32 %v967, 2147483648
  %v1021 = vsel %vm1019, %v1020, %v1018
  %v1022 = vrsqrt.pop %v973
  %v1023 = vmul.f32 %v973, %v1022
  %vm1024 = vcmp.eq.f32.partialorder %v973, inf
  %v1025 = vsel %vm1024, %v973, %v1023
  %vm1026 = vcmp.eq.f32.partialorder %v973, 0.0
  %v1027 = vand.u32 %v973, 2147483648
  %v1028 = vsel %vm1026, %v1027, %v1025
  %v1029 = vrsqrt.pop %v979
  %v1030 = vmul.f32 %v979, %v1029
  %vm1031 = vcmp.eq.f32.partialorder %v979, inf
  %v1032 = vsel %vm1031, %v979, %v1030
  %vm1033 = vcmp.eq.f32.partialorder %v979, 0.0
  %v1034 = vand.u32 %v979, 2147483648
  %v1035 = vsel %vm1033, %v1034, %v1032
  %v1036 = vrsqrt.pop %v985
  %v1037 = vmul.f32 %v985, %v1036
  %vm1038 = vcmp.eq.f32.partialorder %v985, inf
  %v1039 = vsel %vm1038, %v985, %v1037
  %vm1040 = vcmp.eq.f32.partialorder %v985, 0.0
  %v1041 = vand.u32 %v985, 2147483648
  %v1042 = vsel %vm1040, %v1041, %v1039
  %v1043 = vrsqrt.pop %v991
  %v1044 = vmul.f32 %v991, %v1043
  %vm1045 = vcmp.eq.f32.partialorder %v991, inf
  %v1046 = vsel %vm1045, %v991, %v1044
  %vm1047 = vcmp.eq.f32.partialorder %v991, 0.0
  %v1048 = vand.u32 %v991, 2147483648
  %v1049 = vsel %vm1047, %v1048, %v1046
  %vm1050 = vcmask 64512
  %1051 = vst.msk [vmem:[%s3] sm:$0xff] %vm1050, %v1000
  %1052 = vst.msk [vmem:[%s3 + $0x8] sm:$0xff] %vm1050, %v1007
  %1053 = vst.msk [vmem:[%s3 + $0x10] sm:$0xff] %vm1050, %v1014
  %1054 = vst.msk [vmem:[%s3 + $0x18] sm:$0xff] %vm1050, %v1021
  %1055 = vst.msk [vmem:[%s3 + $0x20] sm:$0xff] %vm1050, %v1028
  %1056 = vst.msk [vmem:[%s3 + $0x28] sm:$0xff] %vm1050, %v1035
  %1057 = vst.msk [vmem:[%s3 + $0x30] sm:$0xff] %vm1050, %v1042
  %1058 = vst.msk [vmem:[%s3 + $0x38] sm:$0xff] %vm1050, %v1049
  // Predicated region
  $region14: #{tpu_custom_call.1} parent=0 // pred_check
    _
  $region15: #{tpu_custom_call.1} parent=0 // pred_check_branch
    %1060 = sbr.rel (0) target = $region17
  $region16: #{tpu_custom_call.1} parent=0 // pred_region
    _
  $region17: #{tpu_custom_call.1} parent=0 // pred_fallthru
    _
  // Predicated region
  $region18: #{tpu_custom_call.1} parent=0 // pred_check
    _
  $region19: #{tpu_custom_call.1} parent=0 // pred_check_branch
    %1062 = sbr.rel (0) target = $region21
  $region20: #{tpu_custom_call.1} parent=0 // pred_region
    _
  $region21: #{tpu_custom_call.1} parent=0 // pred_fallthru
    _

</llo_original>
